<compile_context>
chip_gen: v6e
topology: v6e:2x2x1
jax: 0.10.0
libtpu: 0.0.40
codegen_flags: <defaults>
</compile_context>

<pallas_src>
import math
import functools

import jax
import jax.numpy as jnp
from jax.experimental import pallas as pl
from jax.experimental.pallas import tpu as pltpu


def _round_up(x, m):
    return ((x + m - 1) // m) * m


def _res_conv1d_kernel(main_ref, halo_ref, w1_ref, b1_ref, w2_ref, b2_ref,
                       o_ref, slab_ref, *, dilation, res_scale, compute_dtype):
    d = dilation
    tt = main_ref.shape[1]                     # TILE_T (static)

    # Assemble the haloed time slab in VMEM: rows [t*TILE_T, t*TILE_T + TILE_T + 2d)
    # of the padded sequence.  The residual lives inside the same slab (pre-ReLU),
    # so no second copy of x is streamed from HBM.
    slab_ref[0:tt, :] = main_ref[0]                    # (TILE_T, C)
    slab_ref[tt:tt + 2 * d, :] = halo_ref[0, 0]        # (2d, C)

    x_res = slab_ref[d:d + tt, :].astype(jnp.float32)  # pre-ReLU residual rows
    xr = jnp.maximum(slab_ref[...], 0).astype(compute_dtype)   # ReLU once over the slab

    # Dilated 3-tap conv == 3 shifted matmuls accumulated in f32 on the MXU.
    # (K = padded n_in is a multiple of 128, so per-tap K already fills the MXU;
    #  fusing taps into a single (TILE_T, 3*C) matmul is only worthwhile for C < 128.)
    acc = jnp.dot(xr[0:tt, :], w1_ref[0], preferred_element_type=jnp.float32)
    acc = acc + jnp.dot(xr[d:d + tt, :], w1_ref[1], preferred_element_type=jnp.float32)
    acc = acc + jnp.dot(xr[2 * d:2 * d + tt, :], w1_ref[2],
                        preferred_element_type=jnp.float32)

    # Bias added once after accumulation, then ReLU.
    h = jnp.maximum(acc + b1_ref[...], 0.0).astype(compute_dtype)

    # 1x1 conv == plain matmul over channels.
    y = jnp.dot(h, w2_ref[...], preferred_element_type=jnp.float32) + b2_ref[...]

    o_ref[0] = (x_res + res_scale * y).astype(o_ref.dtype)


def res_conv1d_block_nlc(x_nlc, w1, b1, w2, b2, *, dilation=1, res_scale=1.0,
                         compute_dtype=None, tile_t=512):
    """Channel-last entry point.  x_nlc: (B, T, n_in) -> (B, T, n_in).

    w1: (n_state, n_in, 3), b1: (n_state,), w2: (n_in, n_state, 1), b2: (n_in,).
    compute_dtype: dtype fed to the MXU (default: x dtype; jnp.bfloat16 enables
    the fast MXU path on v6e/v7x, accumulation stays f32)."""
    B, T, n_in = x_nlc.shape
    n_state = w1.shape[0]
    d = int(dilation)
    compute_dtype = x_nlc.dtype if compute_dtype is None else compute_dtype

    # Lane-dense channel padding (exact zeros -> exact math, sliced off at the end).
    C_in = _round_up(n_in, 128)
    C_st = _round_up(n_state, 128)

    # Time tiling: bounded VMEM, 512-row sweet spot, sublane-aligned tile size.
    TILE_T = _round_up(min(int(tile_t), _round_up(T, 8)), 8)
    nT = (T + TILE_T - 1) // TILE_T
    T_pad = nT * TILE_T

    # One padded NLC copy: left halo d, right halo (T_pad - T) + d, channel pad.
    # Zero-padding commutes with the leading ReLU (relu(0) == 0).
    xpad = jnp.pad(x_nlc, ((0, 0), (d, T_pad - T + d), (0, C_in - n_in)))
    # Per-tile halo rows [ (t+1)*TILE_T, (t+1)*TILE_T + 2d ) of xpad -> (B, nT, 2d, C_in).
    h_rows = (jnp.arange(nT)[:, None] + 1) * TILE_T + jnp.arange(2 * d)[None, :]
    halo = xpad[:, h_rows, :]

    # Weight / bias prep (tap-major conv3 weights; channels zero-padded).
    w1_t = jnp.transpose(w1, (2, 1, 0)).astype(compute_dtype)      # (3, n_in, n_state)
    w1_p = jnp.zeros((3, C_in, C_st), compute_dtype).at[:, :n_in, :n_state].set(w1_t)
    w2_t = jnp.transpose(w2[:, :, 0], (1, 0)).astype(compute_dtype)  # (n_state, n_in)
    w2_p = jnp.zeros((C_st, C_in), compute_dtype).at[:n_state, :n_in].set(w2_t)
    b1_p = jnp.zeros((1, C_st), jnp.float32).at[0, :n_state].set(b1.astype(jnp.float32))
    b2_p = jnp.zeros((1, C_in), jnp.float32).at[0, :n_in].set(b2.astype(jnp.float32))

    kernel = functools.partial(_res_conv1d_kernel, dilation=d,
                               res_scale=float(res_scale),
                               compute_dtype=compute_dtype)

    out = pl.pallas_call(
        kernel,
        out_shape=jax.ShapeDtypeStruct((B, T_pad, C_in), x_nlc.dtype),
        grid_spec=pltpu.PrefetchScalarGridSpec(
            num_scalar_prefetch=0,
            grid=(B, nT),
            in_specs=[
                pl.BlockSpec((1, TILE_T, C_in), lambda b, t: (b, t, 0)),       # main tile
                pl.BlockSpec((1, 1, 2 * d, C_in), lambda b, t: (b, t, 0, 0)),  # 2d halo
                pl.BlockSpec((3, C_in, C_st), lambda b, t: (0, 0, 0)),         # conv3 W
                pl.BlockSpec((1, C_st), lambda b, t: (0, 0)),                  # conv3 b
                pl.BlockSpec((C_st, C_in), lambda b, t: (0, 0)),               # conv1 W
                pl.BlockSpec((1, C_in), lambda b, t: (0, 0)),                  # conv1 b
            ],
            out_specs=pl.BlockSpec((1, TILE_T, C_in), lambda b, t: (b, t, 0)),
            scratch_shapes=[pltpu.VMEM((TILE_T + 2 * d, C_in), x_nlc.dtype)],
        ),
        compiler_params=pltpu.CompilerParams(
            dimension_semantics=("parallel", "parallel")),
    )(xpad, halo, w1_p, b1_p, w2_p, b2_p)

    return out[:, :T, :n_in]


def res_conv1d_block(x_ncl, w1, b1, w2, b2, *, dilation=1, res_scale=1.0,
                     compute_dtype=None, tile_t=512):
    """PyTorch-layout entry point.  x_ncl: (B, n_in, T) -> (B, n_in, T).
    (In a full model, keep activations in NLC and call res_conv1d_block_nlc
    directly to avoid these two boundary transposes.)"""
    x_nlc = jnp.transpose(x_ncl, (0, 2, 1))
    out_nlc = res_conv1d_block_nlc(x_nlc, w1, b1, w2, b2, dilation=dilation,
                                   res_scale=res_scale, compute_dtype=compute_dtype,
                                   tile_t=tile_t)
    return jnp.transpose(out_nlc, (0, 2, 1))


def _reference(x_ncl, w1, b1, w2, b2, *, dilation, res_scale):
    """Pure-JAX f32 reference of the PyTorch forward."""
    x_nlc = jnp.transpose(x_ncl, (0, 2, 1)).astype(jnp.float32)
    xr = jnp.maximum(x_nlc, 0.0)
    xp = jnp.pad(xr, ((0, 0), (dilation, dilation), (0, 0)))
    T = x_nlc.shape[1]
    w1_t = jnp.transpose(w1, (2, 1, 0)).astype(jnp.float32)   # (3, n_in, n_state)
    h = b1.astype(jnp.float32)[None, None, :]
    for k in range(3):
        h = h + jnp.einsum("btc,cs->bts",
                           xp[:, k * dilation:k * dilation + T, :], w1_t[k])
    h = jnp.maximum(h, 0.0)
    y = jnp.einsum("bts,sc->btc", h,
                   jnp.transpose(w2[:, :, 0], (1, 0)).astype(jnp.float32))
    y = y + b2.astype(jnp.float32)[None, None, :]
    out = x_nlc + res_scale * y
    return jnp.transpose(out, (0, 2, 1)).astype(x_ncl.dtype)


if __name__ == "__main__":
    # Small shapes consistent with the module's forward (NCL input).
    B, n_in, n_state, T = 2, 8, 16, 16
    dilation = 2
    res_scale = 1.0 / math.sqrt(2.0)

    key = jax.random.PRNGKey(0)
    kx, kw1, kb1, kw2, kb2 = jax.random.split(key, 5)

    x = jax.random.normal(kx, (B, n_in, T), dtype=jnp.float32)
    # Conv1d(n_in, n_state, 3): weight (n_state, n_in, 3), bias (n_state,)
    w1 = jax.random.normal(kw1, (n_state, n_in, 3), dtype=jnp.float32) * 0.1
    b1 = jax.random.normal(kb1, (n_state,), dtype=jnp.float32) * 0.1
    # Conv1d(n_state, n_in, 1): weight (n_in, n_state, 1), bias (n_in,)
    w2 = jax.random.normal(kw2, (n_in, n_state, 1), dtype=jnp.float32) * 0.1
    b2 = jax.random.normal(kb2, (n_in,), dtype=jnp.float32) * 0.1

    ref = _reference(x, w1, b1, w2, b2, dilation=dilation, res_scale=res_scale)

    # Exact (f32 MXU) path — preserves the PyTorch module's numerics.
    f32_fn = jax.jit(lambda x_, a, b, c, e: res_conv1d_block(
        x_, a, b, c, e, dilation=dilation, res_scale=res_scale))
    out = jax.block_until_ready(f32_fn(x, w1, b1, w2, b2))
    assert out.shape == (B, n_in, T)
    assert jnp.max(jnp.abs(out - ref)) < 1e-4, "f32 path mismatch vs reference"

    # bf16-MXU path (fast path on v6e/v7x): f32 accumulate, looser tolerance.
    bf16_fn = jax.jit(lambda x_, a, b, c, e: res_conv1d_block(
        x_, a, b, c, e, dilation=dilation, res_scale=res_scale,
        compute_dtype=jnp.bfloat16))
    out_bf16 = jax.block_until_ready(bf16_fn(x, w1, b1, w2, b2))
    assert jnp.max(jnp.abs(out_bf16 - ref)) < 5e-2, "bf16 path mismatch vs reference"

    print("KERNEL_OK")
</pallas_src>

<mosaic_0001>
module attributes {stable_mosaic.version = 11 : i64} {
  func.func @_res_conv1d_kernel(%arg0: i32, %arg1: i32, %arg2: memref<1x16x128xf32, #tpu.memory_space<vmem>>, %arg3: memref<1x1x4x128xf32, #tpu.memory_space<vmem>>, %arg4: memref<3x128x128xf32, #tpu.memory_space<vmem>>, %arg5: memref<1x128xf32, #tpu.memory_space<vmem>>, %arg6: memref<128x128xf32, #tpu.memory_space<vmem>>, %arg7: memref<1x128xf32, #tpu.memory_space<vmem>>, %arg8: memref<1x16x128xf32, #tpu.memory_space<vmem>>, %arg9: memref<20x128xf32, #tpu.memory_space<vmem>>) attributes {dimension_semantics = [#tpu.dimension_semantics<parallel>, #tpu.dimension_semantics<parallel>], iteration_bounds = array<i64: 2, 1>, scalar_prefetch = 0 : i64, scratch_operands = 1 : i64, tpu.core_type = #tpu.core_type<tc>, window_params = [{transform_indices = @transform_0, window_bounds = array<i64: 1, 16, 128>}, {transform_indices = @transform_1, window_bounds = array<i64: 1, 1, 4, 128>}, {pipeline_mode = #tpu.pipeline_mode<synchronous>, transform_indices = @transform_2, window_bounds = array<i64: 3, 128, 128>}, {pipeline_mode = #tpu.pipeline_mode<synchronous>, transform_indices = @transform_3, window_bounds = array<i64: 1, 128>}, {pipeline_mode = #tpu.pipeline_mode<synchronous>, transform_indices = @transform_4, window_bounds = array<i64: 128, 128>}, {pipeline_mode = #tpu.pipeline_mode<synchronous>, transform_indices = @transform_5, window_bounds = array<i64: 1, 128>}, {transform_indices = @transform_6, window_bounds = array<i64: 1, 16, 128>}]} {
    %c0 = arith.constant 0 : index
    %c0_0 = arith.constant 0 : index
    %c0_1 = arith.constant 0 : index
    %0 = vector.load %arg2[%c0, %c0_0, %c0_1] : memref<1x16x128xf32, #tpu.memory_space<vmem>>, vector<1x16x128xf32>
    %1 = vector.shape_cast %0 : vector<1x16x128xf32> to vector<16x128xf32>
    %c0_2 = arith.constant 0 : index
    %c0_3 = arith.constant 0 : index
    %2 = vector.load %arg9[%c0_2, %c0_3] : memref<20x128xf32, #tpu.memory_space<vmem>>, vector<16x128xf32>
    tpu.vector_store %arg9[%c0_2, %c0_3], %1 {strides = array<i32>} : memref<20x128xf32, #tpu.memory_space<vmem>>, vector<16x128xf32>,
    %c0_4 = arith.constant 0 : index
    %c0_5 = arith.constant 0 : index
    %c0_6 = arith.constant 0 : index
    %c0_7 = arith.constant 0 : index
    %3 = vector.load %arg3[%c0_4, %c0_5, %c0_6, %c0_7] : memref<1x1x4x128xf32, #tpu.memory_space<vmem>>, vector<1x1x4x128xf32>
    %4 = vector.shape_cast %3 : vector<1x1x4x128xf32> to vector<4x128xf32>
    %c16 = arith.constant 16 : index
    %c0_8 = arith.constant 0 : index
    %5 = vector.load %arg9[%c16, %c0_8] : memref<20x128xf32, #tpu.memory_space<vmem>>, vector<4x128xf32>
    tpu.vector_store %arg9[%c16, %c0_8], %4 {strides = array<i32>} : memref<20x128xf32, #tpu.memory_space<vmem>>, vector<4x128xf32>,
    %c2 = arith.constant 2 : index
    %c0_9 = arith.constant 0 : index
    %6 = vector.load %arg9[%c2, %c0_9] : memref<20x128xf32, #tpu.memory_space<vmem>>, vector<16x128xf32>
    %c0_10 = arith.constant 0 : index
    %c0_11 = arith.constant 0 : index
    %7 = vector.load %arg9[%c0_10, %c0_11] : memref<20x128xf32, #tpu.memory_space<vmem>>, vector<20x128xf32>
    %cst = arith.constant 0.000000e+00 : f32
    %8 = vector.broadcast %cst : f32 to vector<20x128xf32>
    %9 = arith.maximumf %7, %8 : vector<20x128xf32>
    %10 = vector.extract_strided_slice %9 {offsets = [0, 0], sizes = [16, 128], strides = [1, 1]} : vector<20x128xf32> to vector<16x128xf32>
    %c0_12 = arith.constant 0 : index
    %c0_13 = arith.constant 0 : index
    %c0_14 = arith.constant 0 : index
    %11 = vector.load %arg4[%c0_12, %c0_13, %c0_14] : memref<3x128x128xf32, #tpu.memory_space<vmem>>, vector<1x128x128xf32>
    %12 = vector.shape_cast %11 : vector<1x128x128xf32> to vector<128x128xf32>
    %cst_15 = arith.constant dense<0.000000e+00> : vector<16x128xf32>
    %13 = tpu.matmul %10, %12, %cst_15 {dimension_numbers = #tpu.dot_dimension_numbers<[1], [0], [0], [1], [0, 0, 1, 1], [], []>} : vector<16x128xf32>, vector<128x128xf32>, vector<16x128xf32> -> vector<16x128xf32>
    %14 = vector.extract_strided_slice %9 {offsets = [2, 0], sizes = [16, 128], strides = [1, 1]} : vector<20x128xf32> to vector<16x128xf32>
    %c1 = arith.constant 1 : index
    %c0_16 = arith.constant 0 : index
    %c0_17 = arith.constant 0 : index
    %15 = vector.load %arg4[%c1, %c0_16, %c0_17] : memref<3x128x128xf32, #tpu.memory_space<vmem>>, vector<1x128x128xf32>
    %16 = vector.shape_cast %15 : vector<1x128x128xf32> to vector<128x128xf32>
    %cst_18 = arith.constant dense<0.000000e+00> : vector<16x128xf32>
    %17 = tpu.matmul %14, %16, %cst_18 {dimension_numbers = #tpu.dot_dimension_numbers<[1], [0], [0], [1], [0, 0, 1, 1], [], []>} : vector<16x128xf32>, vector<128x128xf32>, vector<16x128xf32> -> vector<16x128xf32>
    %18 = arith.addf %13, %17 : vector<16x128xf32>
    %19 = vector.extract_strided_slice %9 {offsets = [4, 0], sizes = [16, 128], strides = [1, 1]} : vector<20x128xf32> to vector<16x128xf32>
    %c2_19 = arith.constant 2 : index
    %c0_20 = arith.constant 0 : index
    %c0_21 = arith.constant 0 : index
    %20 = vector.load %arg4[%c2_19, %c0_20, %c0_21] : memref<3x128x128xf32, #tpu.memory_space<vmem>>, vector<1x128x128xf32>
    %21 = vector.shape_cast %20 : vector<1x128x128xf32> to vector<128x128xf32>
    %cst_22 = arith.constant dense<0.000000e+00> : vector<16x128xf32>
    %22 = tpu.matmul %19, %21, %cst_22 {dimension_numbers = #tpu.dot_dimension_numbers<[1], [0], [0], [1], [0, 0, 1, 1], [], []>} : vector<16x128xf32>, vector<128x128xf32>, vector<16x128xf32> -> vector<16x128xf32>
    %23 = arith.addf %18, %22 : vector<16x128xf32>
    %c0_23 = arith.constant 0 : index
    %c0_24 = arith.constant 0 : index
    %24 = vector.load %arg5[%c0_23, %c0_24] : memref<1x128xf32, #tpu.memory_space<vmem>>, vector<1x128xf32>
    %25 = vector.broadcast %24 : vector<1x128xf32> to vector<16x128xf32>
    %26 = arith.addf %23, %25 : vector<16x128xf32>
    %cst_25 = arith.constant 0.000000e+00 : f32
    %27 = vector.broadcast %cst_25 : f32 to vector<16x128xf32>
    %28 = arith.maximumf %26, %27 : vector<16x128xf32>
    %c0_26 = arith.constant 0 : index
    %c0_27 = arith.constant 0 : index
    %29 = vector.load %arg6[%c0_26, %c0_27] : memref<128x128xf32, #tpu.memory_space<vmem>>, vector<128x128xf32>
    %cst_28 = arith.constant dense<0.000000e+00> : vector<16x128xf32>
    %30 = tpu.matmul %28, %29, %cst_28 {dimension_numbers = #tpu.dot_dimension_numbers<[1], [0], [0], [1], [0, 0, 1, 1], [], []>} : vector<16x128xf32>, vector<128x128xf32>, vector<16x128xf32> -> vector<16x128xf32>
    %c0_29 = arith.constant 0 : index
    %c0_30 = arith.constant 0 : index
    %31 = vector.load %arg7[%c0_29, %c0_30] : memref<1x128xf32, #tpu.memory_space<vmem>>, vector<1x128xf32>
    %32 = vector.broadcast %31 : vector<1x128xf32> to vector<16x128xf32>
    %33 = arith.addf %30, %32 : vector<16x128xf32>
    %cst_31 = arith.constant 0.707106769 : f32
    %34 = vector.broadcast %cst_31 : f32 to vector<16x128xf32>
    %35 = arith.mulf %34, %33 : vector<16x128xf32>
    %36 = arith.addf %6, %35 : vector<16x128xf32>
    %c0_32 = arith.constant 0 : index
    %c0_33 = arith.constant 0 : index
    %c0_34 = arith.constant 0 : index
    %37 = vector.load %arg8[%c0_32, %c0_33, %c0_34] : memref<1x16x128xf32, #tpu.memory_space<vmem>>, vector<1x16x128xf32>
    %38 = vector.shape_cast %37 : vector<1x16x128xf32> to vector<16x128xf32>
    %39 = vector.shape_cast %36 : vector<16x128xf32> to vector<1x16x128xf32>
    tpu.vector_store %arg8[%c0_32, %c0_33, %c0_34], %39 {strides = array<i32>} : memref<1x16x128xf32, #tpu.memory_space<vmem>>, vector<1x16x128xf32>,
    return
  }
  func.func @transform_0(%arg0: i32, %arg1: i32) -> (i32, i32, i32) {
    %c0_i32 = arith.constant 0 : i32
    %c0_i32_0 = arith.constant 0 : i32
    return %arg0, %arg1, %c0_i32 : i32, i32, i32
  }
  func.func @transform_1(%arg0: i32, %arg1: i32) -> (i32, i32, i32, i32) {
    %c0_i32 = arith.constant 0 : i32
    %c0_i32_0 = arith.constant 0 : i32
    %c0_i32_1 = arith.constant 0 : i32
    return %arg0, %arg1, %c0_i32, %c0_i32_0 : i32, i32, i32, i32
  }
  func.func @transform_2(%arg0: i32, %arg1: i32) -> (i32, i32, i32) {
    %c0_i32 = arith.constant 0 : i32
    %c0_i32_0 = arith.constant 0 : i32
    %c0_i32_1 = arith.constant 0 : i32
    %c0_i32_2 = arith.constant 0 : i32
    return %c0_i32, %c0_i32_0, %c0_i32_1 : i32, i32, i32
  }
  func.func @transform_3(%arg0: i32, %arg1: i32) -> (i32, i32) {
    %c0_i32 = arith.constant 0 : i32
    %c0_i32_0 = arith.constant 0 : i32
    %c0_i32_1 = arith.constant 0 : i32
    return %c0_i32, %c0_i32_0 : i32, i32
  }
  func.func @transform_4(%arg0: i32, %arg1: i32) -> (i32, i32) {
    %c0_i32 = arith.constant 0 : i32
    %c0_i32_0 = arith.constant 0 : i32
    %c0_i32_1 = arith.constant 0 : i32
    return %c0_i32, %c0_i32_0 : i32, i32
  }
  func.func @transform_5(%arg0: i32, %arg1: i32) -> (i32, i32) {
    %c0_i32 = arith.constant 0 : i32
    %c0_i32_0 = arith.constant 0 : i32
    %c0_i32_1 = arith.constant 0 : i32
    return %c0_i32, %c0_i32_0 : i32, i32
  }
  func.func @transform_6(%arg0: i32, %arg1: i32) -> (i32, i32, i32) {
    %c0_i32 = arith.constant 0 : i32
    %c0_i32_0 = arith.constant 0 : i32
    return %arg0, %arg1, %c0_i32 : i32, i32, i32
  }
}

</mosaic_0001>

<llo_original>
// kernel: _lambda_.1
$region0: #{_lambda_.1}
  #allocation0 [shape = 'u32[]', space=smem, size = 0x4, offset = 0x4, fixed_abs, tag = 'smem constant byte address 0x4 - core index']
  #allocation1 [shape = 'u32[144,128]{1,0:T(1,128)}', space=vmem, size = 0x12000, scoped, tag = 'internal scratch']
  #allocation2 [shape = 'f32[20,128]{1,0:T(8,128)}', space=vmem, size = 0x3000, scoped, tag = 'scratch operand']
  %s0 = inlined_call_operand.vmem [shape: f32[2,20,128], index: 0, kind: input, shape index: {}]
  %s1 = inlined_call_operand.vmem [shape: f32[2,1,4,128], index: 1, kind: input, shape index: {}]
  %s2 = inlined_call_operand.vmem [shape: f32[3,128,128], index: 2, kind: input, shape index: {}]
  %s3 = inlined_call_operand.vmem [shape: f32[1,128], index: 3, kind: input, shape index: {}]
  %s4 = inlined_call_operand.vmem [shape: f32[128,128], index: 4, kind: input, shape index: {}]
  %s5 = inlined_call_operand.vmem [shape: f32[1,128], index: 5, kind: input, shape index: {}]
  %s6 = inlined_call_operand.vmem [shape: f32[2,16,128], index: 6, kind: output, shape index: {}]
  %s7 = sld [smem:[#allocation0]]
  $region57: #{_lambda_.1} parent=0
    _
  %s9 = ssub.s32 1, %s7
  %s10 = scalar_select 0, %s9, %s7
  loop: start=0, step=1, limit=4
  $region2: #{_lambda_.1} parent=0 // loop_pre_header
    _
  $region3: #{_lambda_.1} parent=0 // loop_header
    %s12 = sphi 0, %s16
    %p13 = scmp.ge.s32.totalorder %s12, 4
    %s19 = sphi 0, %s31
    %s20 = sphi 0, %s27
    %s21 = sphi 0, %s19
    %s22 = sphi 0, %s20
    %s23 = sphi 0, %s21
    %s24 = sphi 0, %s22
    %s36 = sphi 0, %s38
    %s39 = sphi 0, %s36
    %s40 = sphi 0, %s39
    %s56 = sphi 0, %s40
    %s64 = sphi 0, %s66
    %s67 = sphi 0, %s64
    %s68 = sphi 0, %s67
    %s84 = sphi 0, %s68
    %s88 = sphi 0, %s88
    %s90 = sphi 0, %s88
    %s91 = sphi 0, %s90
    %s105 = sphi 0, %s91
    %s109 = sphi 0, %s109
    %s111 = sphi 0, %s109
    %s112 = sphi 0, %s111
    %s126 = sphi 0, %s112
    %s130 = sphi 0, %s130
    %s132 = sphi 0, %s130
    %s133 = sphi 0, %s132
    %s147 = sphi 0, %s133
    %s151 = sphi 0, %s151
    %s153 = sphi 0, %s151
    %s154 = sphi 0, %s153
    %s168 = sphi 0, %s154
    %s176 = sphi 0, %s178
    %s179 = sphi 0, %s176
    %s180 = sphi 0, %s179
    %s196 = sphi 0, %s180
  $region4: #{_lambda_.1} parent=0 // loop_header_branch
    %15 = sbr.rel (%p13) target = $region8
  $region5: #{_lambda_.1} parent=0 // loop_body
    %s17 = ssub.s32 %s12, 1
    %s18 = ssub.s32 %s12, 2
    %s25 = sadd.s32 1, %s20
    %p26 = scmp.ge.s32.totalorder %s25, 1
    %s27 = scalar_select %p26, 0, %s25
    %s28 = sadd.s32 1, %s19
    %s29 = scalar_select %p26, %s28, %s19
    %p30 = scmp.ge.s32.totalorder %s29, 2
    %s31 = scalar_select %p30, 0, %s29
    %s32 = ssub.s32 %s19, %s31
    %s33 = ssub.s32 %s20, %s27
    %s34 = sor.u32 %s32, %s33
    %p35 = scmp.eq.s32.totalorder %s34, 0
    %s37 = sadd.s32 %s36, 1
    %s38 = scalar_select %p35, %s36, %s37
    %p41 = pneg %p35
    %p42 = scmp.eq.s32.totalorder %s12, 1
    %p43 = por %p41, %p42
    %p44 = scmp.ne.s32.totalorder %s36, %s39
    %p45 = scmp.eq.s32.totalorder %s12, 0
    %p46 = por %p44, %p45
    %p47 = scmp.ne.s32.totalorder %s36, %s39
    %p48 = scmp.eq.s32.totalorder %s17, 1
    %p49 = por %p47, %p48
    %p50 = scmp.ne.s32.totalorder %s39, %s40
    %p51 = scmp.eq.s32.totalorder %s17, 0
    %p52 = por %p50, %p51
    %p53 = scmp.ne.s32.totalorder %s39, %s40
    %p54 = scmp.eq.s32.totalorder %s18, 1
    %p55 = por %p53, %p54
    %p57 = scmp.ne.s32.totalorder %s40, %s56
    %p58 = scmp.eq.s32.totalorder %s18, 0
    %p59 = por %p57, %p58
    %s60 = ssub.s32 %s19, %s31
    %s61 = ssub.s32 %s20, %s27
    %s62 = sor.u32 %s60, %s61
    %p63 = scmp.eq.s32.totalorder %s62, 0
    %s65 = sadd.s32 %s64, 1
    %s66 = scalar_select %p63, %s64, %s65
    %p69 = pneg %p63
    %p70 = scmp.eq.s32.totalorder %s12, 1
    %p71 = por %p69, %p70
    %p72 = scmp.ne.s32.totalorder %s64, %s67
    %p73 = scmp.eq.s32.totalorder %s12, 0
    %p74 = por %p72, %p73
    %p75 = scmp.ne.s32.totalorder %s64, %s67
    %p76 = scmp.eq.s32.totalorder %s17, 1
    %p77 = por %p75, %p76
    %p78 = scmp.ne.s32.totalorder %s67, %s68
    %p79 = scmp.eq.s32.totalorder %s17, 0
    %p80 = por %p78, %p79
    %p81 = scmp.ne.s32.totalorder %s67, %s68
    %p82 = scmp.eq.s32.totalorder %s18, 1
    %p83 = por %p81, %p82
    %p85 = scmp.ne.s32.totalorder %s68, %s84
    %p86 = scmp.eq.s32.totalorder %s18, 0
    %p87 = por %p85, %p86
    %s89 = sadd.s32 %s88, 1
    %p92 = scmp.eq.s32.totalorder %s12, 1
    %p93 = scmp.ne.s32.totalorder %s88, %s90
    %p94 = scmp.eq.s32.totalorder %s12, 0
    %p95 = por %p93, %p94
    %p96 = scmp.ne.s32.totalorder %s88, %s90
    %p97 = scmp.eq.s32.totalorder %s17, 1
    %p98 = por %p96, %p97
    %p99 = scmp.ne.s32.totalorder %s90, %s91
    %p100 = scmp.eq.s32.totalorder %s17, 0
    %p101 = por %p99, %p100
    %p102 = scmp.ne.s32.totalorder %s90, %s91
    %p103 = scmp.eq.s32.totalorder %s18, 1
    %p104 = por %p102, %p103
    %p106 = scmp.ne.s32.totalorder %s91, %s105
    %p107 = scmp.eq.s32.totalorder %s18, 0
    %p108 = por %p106, %p107
    %s110 = sadd.s32 %s109, 1
    %p113 = scmp.eq.s32.totalorder %s12, 1
    %p114 = scmp.ne.s32.totalorder %s109, %s111
    %p115 = scmp.eq.s32.totalorder %s12, 0
    %p116 = por %p114, %p115
    %p117 = scmp.ne.s32.totalorder %s109, %s111
    %p118 = scmp.eq.s32.totalorder %s17, 1
    %p119 = por %p117, %p118
    %p120 = scmp.ne.s32.totalorder %s111, %s112
    %p121 = scmp.eq.s32.totalorder %s17, 0
    %p122 = por %p120, %p121
    %p123 = scmp.ne.s32.totalorder %s111, %s112
    %p124 = scmp.eq.s32.totalorder %s18, 1
    %p125 = por %p123, %p124
    %p127 = scmp.ne.s32.totalorder %s112, %s126
    %p128 = scmp.eq.s32.totalorder %s18, 0
    %p129 = por %p127, %p128
    %s131 = sadd.s32 %s130, 1
    %p134 = scmp.eq.s32.totalorder %s12, 1
    %p135 = scmp.ne.s32.totalorder %s130, %s132
    %p136 = scmp.eq.s32.totalorder %s12, 0
    %p137 = por %p135, %p136
    %p138 = scmp.ne.s32.totalorder %s130, %s132
    %p139 = scmp.eq.s32.totalorder %s17, 1
    %p140 = por %p138, %p139
    %p141 = scmp.ne.s32.totalorder %s132, %s133
    %p142 = scmp.eq.s32.totalorder %s17, 0
    %p143 = por %p141, %p142
    %p144 = scmp.ne.s32.totalorder %s132, %s133
    %p145 = scmp.eq.s32.totalorder %s18, 1
    %p146 = por %p144, %p145
    %p148 = scmp.ne.s32.totalorder %s133, %s147
    %p149 = scmp.eq.s32.totalorder %s18, 0
    %p150 = por %p148, %p149
    %s152 = sadd.s32 %s151, 1
    %p155 = scmp.eq.s32.totalorder %s12, 1
    %p156 = scmp.ne.s32.totalorder %s151, %s153
    %p157 = scmp.eq.s32.totalorder %s12, 0
    %p158 = por %p156, %p157
    %p159 = scmp.ne.s32.totalorder %s151, %s153
    %p160 = scmp.eq.s32.totalorder %s17, 1
    %p161 = por %p159, %p160
    %p162 = scmp.ne.s32.totalorder %s153, %s154
    %p163 = scmp.eq.s32.totalorder %s17, 0
    %p164 = por %p162, %p163
    %p165 = scmp.ne.s32.totalorder %s153, %s154
    %p166 = scmp.eq.s32.totalorder %s18, 1
    %p167 = por %p165, %p166
    %p169 = scmp.ne.s32.totalorder %s154, %s168
    %p170 = scmp.eq.s32.totalorder %s18, 0
    %p171 = por %p169, %p170
    %s172 = ssub.s32 %s19, %s31
    %s173 = ssub.s32 %s20, %s27
    %s174 = sor.u32 %s172, %s173
    %p175 = scmp.eq.s32.totalorder %s174, 0
    %s177 = sadd.s32 %s176, 1
    %s178 = scalar_select %p175, %s176, %s177
    %p181 = pneg %p175
    %p182 = scmp.eq.s32.totalorder %s12, 1
    %p183 = por %p181, %p182
    %p184 = scmp.ne.s32.totalorder %s176, %s179
    %p185 = scmp.eq.s32.totalorder %s12, 0
    %p186 = por %p184, %p185
    %p187 = scmp.ne.s32.totalorder %s176, %s179
    %p188 = scmp.eq.s32.totalorder %s17, 1
    %p189 = por %p187, %p188
    %p190 = scmp.ne.s32.totalorder %s179, %s180
    %p191 = scmp.eq.s32.totalorder %s17, 0
    %p192 = por %p190, %p191
    %p193 = scmp.ne.s32.totalorder %s179, %s180
    %p194 = scmp.eq.s32.totalorder %s18, 1
    %p195 = por %p193, %p194
    %p197 = scmp.ne.s32.totalorder %s180, %s196
    %p198 = scmp.eq.s32.totalorder %s18, 0
    %p199 = por %p197, %p198
    %p200 = scmp.le.s32.totalorder 1, %s12
    %p201 = scmp.lt.s32.totalorder %s12, 3
    %p202 = pnand %p200, %p201
    %p203 = pneg %p202
    // Predicated region
    $region9: #{_lambda_.1} parent=5 // pred_check
      _
    $region10: #{_lambda_.1} parent=5 // pred_check_branch
      %205 = sbr.rel (%p202) target = $region12
    $region11: #{_lambda_.1} parent=5 // pred_region
      %s206 = ssub.s32 %s12, 1
      // Predicated region
      $region13: #{_lambda_.1} parent=11 // pred_check
        %p207 = pneg %p101
      $region14: #{_lambda_.1} parent=11 // pred_check_branch
        %209 = sbr.rel (%p207) target = $region16
      $region15: #{_lambda_.1} parent=11 // pred_region
        _
      $region16: #{_lambda_.1} parent=11 // pred_fallthru
        _
      // Predicated region
      $region17: #{_lambda_.1} parent=11 // pred_check
        %p210 = pneg %p122
      $region18: #{_lambda_.1} parent=11 // pred_check_branch
        %212 = sbr.rel (%p210) target = $region20
      $region19: #{_lambda_.1} parent=11 // pred_region
        _
      $region20: #{_lambda_.1} parent=11 // pred_fallthru
        _
      // Predicated region
      $region21: #{_lambda_.1} parent=11 // pred_check
        %p213 = pneg %p143
      $region22: #{_lambda_.1} parent=11 // pred_check_branch
        %215 = sbr.rel (%p213) target = $region24
      $region23: #{_lambda_.1} parent=11 // pred_region
        _
      $region24: #{_lambda_.1} parent=11 // pred_fallthru
        _
      // Predicated region
      $region25: #{_lambda_.1} parent=11 // pred_check
        %p216 = pneg %p164
      $region26: #{_lambda_.1} parent=11 // pred_check_branch
        %218 = sbr.rel (%p216) target = $region28
      $region27: #{_lambda_.1} parent=11 // pred_region
        _
      $region28: #{_lambda_.1} parent=11 // pred_fallthru
        _
    $region12: #{_lambda_.1} parent=5 // pred_fallthru
      _
    %p219 = scmp.lt.s32.totalorder %s12, 2
    // Predicated region
    $region29: #{_lambda_.1} parent=5 // pred_check
      %p220 = pneg %p219
    $region30: #{_lambda_.1} parent=5 // pred_check_branch
      %222 = sbr.rel (%p220) target = $region32
    $region31: #{_lambda_.1} parent=5 // pred_region
      // Predicated region
      $region33: #{_lambda_.1} parent=31 // pred_check
        %p223 = pneg %p46
      $region34: #{_lambda_.1} parent=31 // pred_check_branch
        %225 = sbr.rel (%p223) target = $region36
      $region35: #{_lambda_.1} parent=31 // pred_region
        %s226 = smul.u32 2, %s20
        %s227 = ssub.s32 3, %s226
        %p228 = scmp.lt.s32.totalorder %s227, 2
        %s229 = scalar_select %p228, %s227, 2
        %s230 = smul.u32 128, %s229
        %p231 = scmp.lt.s32.totalorder %s19, 1
        %s232 = scalar_select %p231, %s19, 1
        %p233 = scmp.lt.s32.totalorder %s226, 2
        %s234 = scalar_select %p233, %s226, 2
        %s235 = smul.addr %s232, 3
        %s236 = sadd.s32 %s234, %s235
        %s237 = smul.addr %s236, 8
        %s238 = scalar_lea.vmem %s0, %s237
        %s239 = smul.u32 2, %s20
        %s240 = ssub.s32 3, %s239
        %p241 = scmp.lt.s32.totalorder %s240, 2
        %s242 = scalar_select %p241, %s240, 2
        %s243 = smul.u32 128, %s242
      $region36: #{_lambda_.1} parent=31 // pred_fallthru
        _
      // Predicated region
      $region37: #{_lambda_.1} parent=31 // pred_check
        %p244 = pneg %p74
      $region38: #{_lambda_.1} parent=31 // pred_check_branch
        %246 = sbr.rel (%p244) target = $region40
      $region39: #{_lambda_.1} parent=31 // pred_region
        %p247 = scmp.lt.s32.totalorder %s19, 1
        %s248 = scalar_select %p247, %s19, 1
        %p249 = scmp.lt.s32.totalorder %s20, 0
        %s250 = scalar_select %p249, %s20, 0
        %s251 = sadd.s32 %s250, %s248
        %s252 = smul.addr %s251, 4
        %s253 = scalar_lea.vmem %s1, %s252
      $region40: #{_lambda_.1} parent=31 // pred_fallthru
        _
    $region32: #{_lambda_.1} parent=5 // pred_fallthru
      _
    %p254 = scmp.le.s32.totalorder 1, %s12
    %p255 = scmp.lt.s32.totalorder %s12, 3
    %p256 = pnand %p254, %p255
    %p257 = pneg %p256
    // Predicated region
    $region41: #{_lambda_.1} parent=5 // pred_check
      _
    $region42: #{_lambda_.1} parent=5 // pred_check_branch
      %259 = sbr.rel (%p256) target = $region44
    $region43: #{_lambda_.1} parent=5 // pred_region
      %s260 = ssub.s32 %s12, 1
      %s261 = smul.u32 2, %s22
      %s262 = ssub.s32 3, %s261
      %p263 = scmp.lt.s32.totalorder %s262, 2
      %s264 = scalar_select %p263, %s262, 2
      %s265 = smul.u32 128, %s264
      %p266 = scmp.lt.s32.totalorder %s21, 1
      %s267 = scalar_select %p266, %s21, 1
      %p268 = scmp.lt.s32.totalorder %s261, 2
      %s269 = scalar_select %p268, %s261, 2
      %s270 = smul.addr %s267, 3
      %s271 = sadd.s32 %s269, %s270
      %s272 = smul.addr %s271, 8
      %s273 = scalar_lea.vmem %s0, %s272
      %p274 = pneg %p52
      %p275 = pneg %p49
      %p276 = scmp.lt.s32.totalorder %s21, 1
      %s277 = scalar_select %p276, %s21, 1
      %p278 = scmp.lt.s32.totalorder %s22, 0
      %s279 = scalar_select %p278, %s22, 0
      %s280 = sadd.s32 %s279, %s277
      %s281 = smul.addr %s280, 4
      %s282 = scalar_lea.vmem %s1, %s281
      %p283 = pneg %p80
      %p284 = pneg %p77
      %p285 = pneg %p101
      %p286 = pneg %p98
      %p287 = pneg %p122
      %p288 = pneg %p119
      %p289 = pneg %p143
      %p290 = pneg %p140
      %p291 = pneg %p164
      %p292 = pneg %p161
      %p293 = pneg %p192
      %p294 = pneg %p189
      %s295 = smul.u32 2, %s22
      %p296 = scmp.lt.s32.totalorder %s21, 1
      %s297 = scalar_select %p296, %s21, 1
      %p298 = scmp.lt.s32.totalorder %s295, 1
      %s299 = scalar_select %p298, %s295, 1
      %s300 = smul.addr %s297, 2
      %s301 = sadd.s32 %s299, %s300
      %s302 = smul.addr %s301, 8
      %s303 = scalar_lea.vmem %s6, %s302
      %s304 = smul.u32 2, %s22
      %s305 = ssub.s32 3, %s304
      %p306 = scmp.lt.s32.totalorder %s305, 2
      %s307 = scalar_select %p306, %s305, 2
      %s308 = smul.u32 128, %s307
      %p309 = scmp.lt.s32.totalorder %s21, 1
      %s310 = scalar_select %p309, %s21, 1
      %p311 = scmp.lt.s32.totalorder %s304, 2
      %s312 = scalar_select %p311, %s304, 2
      %s313 = smul.addr %s310, 3
      %s314 = sadd.s32 %s312, %s313
      %s315 = smul.addr %s314, 8
      %s316 = scalar_lea.vmem %s0, %s315
      %s317 = smul.u32 2, %s22
      %s318 = ssub.s32 3, %s317
      %p319 = scmp.lt.s32.totalorder %s318, 2
      %s320 = scalar_select %p319, %s318, 2
      %s321 = smul.u32 128, %s320
      %p322 = scmp.lt.s32.totalorder %s21, 1
      %s323 = scalar_select %p322, %s21, 1
      %p324 = scmp.lt.s32.totalorder %s22, 0
      %s325 = scalar_select %p324, %s22, 0
      %s326 = sadd.s32 %s325, %s323
      %s327 = smul.addr %s326, 4
      %s328 = scalar_lea.vmem %s1, %s327
      %s329 = smul.u32 2, %s22
      %p330 = scmp.lt.s32.totalorder %s21, 1
      %s331 = scalar_select %p330, %s21, 1
      %p332 = scmp.lt.s32.totalorder %s329, 1
      %s333 = scalar_select %p332, %s329, 1
      %s334 = smul.addr %s331, 2
      %s335 = sadd.s32 %s333, %s334
      %s336 = smul.addr %s335, 8
      %s337 = scalar_lea.vmem %s6, %s336
      %s338 = smul.u32 2, %s22
      %v339 = vld [vmem:[%s316] sm:$0xff]
      %v340 = vld [vmem:[%s316 + $0x8] sm:$0xff]
      %341 = vst [vmem:[#allocation2] sm:$0xff] %v339
      %342 = vst [vmem:[#allocation2 + $0x8] sm:$0xff] %v340
      %v343 = vld [vmem:[%s328] sm:$0xf]
      %344 = vst [vmem:[#allocation2 + $0x10] sm:$0xf] %v343
      %v345 = vld [vmem:[#allocation2 + $0x2] sm:$0xff]
      %v346 = vld [vmem:[#allocation2 + $0xa] sm:$0xff]
      %v347 = vld [vmem:[#allocation2] sm:$0xff]
      %v348 = vld [vmem:[#allocation2 + $0x8] sm:$0xff]
      %v349 = vld [vmem:[#allocation2 + $0x10] sm:$0xf]
      %v350 = vmax.f32 %v347, 0.0
      %v351 = vmax.f32 %v348, 0.0
      %v352 = vmax.f32 %v349, 0.0
      %v353 = vld [vmem:[%s2] sm:$0xff]
      %v354 = vld [vmem:[%s2 + $0x8] sm:$0xff]
      %v355 = vld [vmem:[%s2 + $0x10] sm:$0xff]
      %v356 = vld [vmem:[%s2 + $0x18] sm:$0xff]
      %v357 = vld [vmem:[%s2 + $0x20] sm:$0xff]
      %v358 = vld [vmem:[%s2 + $0x28] sm:$0xff]
      %v359 = vld [vmem:[%s2 + $0x30] sm:$0xff]
      %v360 = vld [vmem:[%s2 + $0x38] sm:$0xff]
      %v361 = vld [vmem:[%s2 + $0x40] sm:$0xff]
      %v362 = vld [vmem:[%s2 + $0x48] sm:$0xff]
      %v363 = vld [vmem:[%s2 + $0x50] sm:$0xff]
      %v364 = vld [vmem:[%s2 + $0x58] sm:$0xff]
      %v365 = vld [vmem:[%s2 + $0x60] sm:$0xff]
      %v366 = vld [vmem:[%s2 + $0x68] sm:$0xff]
      %v367 = vld [vmem:[%s2 + $0x70] sm:$0xff]
      %v368 = vld [vmem:[%s2 + $0x78] sm:$0xff]
      %s369 = scalar_lea.vmem %s2, 128
      %v370 = vld [vmem:[%s369] sm:$0xff]
      %v371 = vld [vmem:[%s369 + $0x8] sm:$0xff]
      %v372 = vld [vmem:[%s369 + $0x10] sm:$0xff]
      %v373 = vld [vmem:[%s369 + $0x18] sm:$0xff]
      %v374 = vld [vmem:[%s369 + $0x20] sm:$0xff]
      %v375 = vld [vmem:[%s369 + $0x28] sm:$0xff]
      %v376 = vld [vmem:[%s369 + $0x30] sm:$0xff]
      %v377 = vld [vmem:[%s369 + $0x38] sm:$0xff]
      %v378 = vld [vmem:[%s369 + $0x40] sm:$0xff]
      %v379 = vld [vmem:[%s369 + $0x48] sm:$0xff]
      %v380 = vld [vmem:[%s369 + $0x50] sm:$0xff]
      %v381 = vld [vmem:[%s369 + $0x58] sm:$0xff]
      %v382 = vld [vmem:[%s369 + $0x60] sm:$0xff]
      %v383 = vld [vmem:[%s369 + $0x68] sm:$0xff]
      %v384 = vld [vmem:[%s369 + $0x70] sm:$0xff]
      %v385 = vld [vmem:[%s369 + $0x78] sm:$0xff]
      %vm389 = vcmask 1045504
      %v390 = vrot.slane %v350, 2
      %v391 = vrot.slane %v351, 2
      %v392 = vsel %vm389, %v390, %v391
      %v393 = vrot.slane %v352, 2
      %v394 = vsel %vm389, %v391, %v393
      %397 = vmatprep.subr.mxu0 0.0
      %398 = vmatpush1.msra.mxu0 %v385
      %399 = vmatprep.subr.mxu0 0.0
      %400 = vmatpush1.msra.mxu0 %v384
      %401 = vmatprep.subr.mxu0 0.0
      %402 = vmatpush1.msra.mxu0 %v383
      %403 = vmatprep.subr.mxu0 0.0
      %404 = vmatpush1.msra.mxu0 %v382
      %405 = vmatprep.subr.mxu0 0.0
      %406 = vmatpush1.msra.mxu0 %v381
      %407 = vmatprep.subr.mxu0 0.0
      %408 = vmatpush1.msra.mxu0 %v380
      %409 = vmatprep.subr.mxu0 0.0
      %410 = vmatpush1.msra.mxu0 %v379
      %411 = vmatprep.subr.mxu0 0.0
      %412 = vmatpush1.msra.mxu0 %v378
      %413 = vmatprep.subr.mxu0 0.0
      %414 = vmatpush1.msra.mxu0 %v377
      %415 = vmatprep.subr.mxu0 0.0
      %416 = vmatpush1.msra.mxu0 %v376
      %417 = vmatprep.subr.mxu0 0.0
      %418 = vmatpush1.msra.mxu0 %v375
      %419 = vmatprep.subr.mxu0 0.0
      %420 = vmatpush1.msra.mxu0 %v374
      %421 = vmatprep.subr.mxu0 0.0
      %422 = vmatpush1.msra.mxu0 %v373
      %423 = vmatprep.subr.mxu0 0.0
      %424 = vmatpush1.msra.mxu0 %v372
      %425 = vmatprep.subr.mxu0 0.0
      %426 = vmatpush1.msra.mxu0 %v371
      %427 = vmatprep.subr.mxu0 0.0
      %428 = vmatpush1.msra.mxu0 %v370
      %429 = vmatprep.subr.mxu0 0.0
      %430 = vmatpush2.msra.mxu0 0.0
      %431 = vmatprep.subr.mxu0 0.0
      %432 = vmatpush2.msra.mxu0 0.0
      %433 = vmatprep.subr.mxu0 0.0
      %434 = vmatpush2.msra.mxu0 0.0
      %435 = vmatprep.subr.mxu0 0.0
      %436 = vmatpush2.msra.mxu0 0.0
      %437 = vmatprep.subr.mxu0 0.0
      %438 = vmatpush2.msra.mxu0 0.0
      %439 = vmatprep.subr.mxu0 0.0
      %440 = vmatpush2.msra.mxu0 0.0
      %441 = vmatprep.subr.mxu0 0.0
      %442 = vmatpush2.msra.mxu0 0.0
      %443 = vmatprep.subr.mxu0 0.0
      %444 = vmatpush2.msra.mxu0 0.0
      %445 = vmatprep.subr.mxu0 0.0
      %446 = vmatpush2.msra.mxu0 0.0
      %447 = vmatprep.subr.mxu0 0.0
      %448 = vmatpush2.msra.mxu0 0.0
      %449 = vmatprep.subr.mxu0 0.0
      %450 = vmatpush2.msra.mxu0 0.0
      %451 = vmatprep.subr.mxu0 0.0
      %452 = vmatpush2.msra.mxu0 0.0
      %453 = vmatprep.subr.mxu0 0.0
      %454 = vmatpush2.msra.mxu0 0.0
      %455 = vmatprep.subr.mxu0 0.0
      %456 = vmatpush2.msra.mxu0 0.0
      %457 = vmatprep.subr.mxu0 0.0
      %458 = vmatpush2.msra.mxu0 0.0
      %459 = vmatprep.subr.mxu0 0.0
      %460 = vmatpush2.msra.mxu0 0.0
      %461 = vmatprep.mubr.f32.mxu0 0.0
      %462 = vmatmul.mubr.f32.gmra.mxu0 %v392
      %v463 = vpop.f32.mrf.mxu0
      %v464 = vadd.f32 0.0, %v463
      %v465 = vpop.f32.mrf.mxu0
      %466 = vmatprep.mubr.f32.mxu0 0.0
      %467 = vmatmul.mubr.f32.gmra.mxu0 %v394
      %v468 = vpop.f32.mrf.mxu0
      %v469 = vadd.f32 0.0, %v468
      %v470 = vpop.f32.mrf.mxu0
      %471 = vdwg.mxu0
      %472 = vmatprep.subr.mxu0 0.0
      %473 = vmatpush1.msra.mxu0 %v368
      %474 = vmatprep.subr.mxu0 0.0
      %475 = vmatpush1.msra.mxu0 %v367
      %476 = vmatprep.subr.mxu0 0.0
      %477 = vmatpush1.msra.mxu0 %v366
      %478 = vmatprep.subr.mxu0 0.0
      %479 = vmatpush1.msra.mxu0 %v365
      %480 = vmatprep.subr.mxu0 0.0
      %481 = vmatpush1.msra.mxu0 %v364
      %482 = vmatprep.subr.mxu0 0.0
      %483 = vmatpush1.msra.mxu0 %v363
      %484 = vmatprep.subr.mxu0 0.0
      %485 = vmatpush1.msra.mxu0 %v362
      %486 = vmatprep.subr.mxu0 0.0
      %487 = vmatpush1.msra.mxu0 %v361
      %488 = vmatprep.subr.mxu0 0.0
      %489 = vmatpush1.msra.mxu0 %v360
      %490 = vmatprep.subr.mxu0 0.0
      %491 = vmatpush1.msra.mxu0 %v359
      %492 = vmatprep.subr.mxu0 0.0
      %493 = vmatpush1.msra.mxu0 %v358
      %494 = vmatprep.subr.mxu0 0.0
      %495 = vmatpush1.msra.mxu0 %v357
      %496 = vmatprep.subr.mxu0 0.0
      %497 = vmatpush1.msra.mxu0 %v356
      %498 = vmatprep.subr.mxu0 0.0
      %499 = vmatpush1.msra.mxu0 %v355
      %500 = vmatprep.subr.mxu0 0.0
      %501 = vmatpush1.msra.mxu0 %v354
      %502 = vmatprep.subr.mxu0 0.0
      %503 = vmatpush1.msra.mxu0 %v353
      %504 = vmatprep.subr.mxu0 0.0
      %505 = vmatpush2.msra.mxu0 0.0
      %506 = vmatprep.subr.mxu0 0.0
      %507 = vmatpush2.msra.mxu0 0.0
      %508 = vmatprep.subr.mxu0 0.0
      %509 = vmatpush2.msra.mxu0 0.0
      %510 = vmatprep.subr.mxu0 0.0
      %511 = vmatpush2.msra.mxu0 0.0
      %512 = vmatprep.subr.mxu0 0.0
      %513 = vmatpush2.msra.mxu0 0.0
      %514 = vmatprep.subr.mxu0 0.0
      %515 = vmatpush2.msra.mxu0 0.0
      %516 = vmatprep.subr.mxu0 0.0
      %517 = vmatpush2.msra.mxu0 0.0
      %518 = vmatprep.subr.mxu0 0.0
      %519 = vmatpush2.msra.mxu0 0.0
      %520 = vmatprep.subr.mxu0 0.0
      %521 = vmatpush2.msra.mxu0 0.0
      %522 = vmatprep.subr.mxu0 0.0
      %523 = vmatpush2.msra.mxu0 0.0
      %524 = vmatprep.subr.mxu0 0.0
      %525 = vmatpush2.msra.mxu0 0.0
      %526 = vmatprep.subr.mxu0 0.0
      %527 = vmatpush2.msra.mxu0 0.0
      %528 = vmatprep.subr.mxu0 0.0
      %529 = vmatpush2.msra.mxu0 0.0
      %530 = vmatprep.subr.mxu0 0.0
      %531 = vmatpush2.msra.mxu0 0.0
      %532 = vmatprep.subr.mxu0 0.0
      %533 = vmatpush2.msra.mxu0 0.0
      %534 = vmatprep.subr.mxu0 0.0
      %535 = vmatpush2.msra.mxu0 0.0
      %536 = vmatprep.mubr.f32.mxu0 0.0
      %537 = vmatmul.mubr.f32.gmra.mxu0 %v350
      %v538 = vpop.f32.mrf.mxu0
      %v539 = vadd.f32 %v464, %v538
      %v540 = vpop.f32.mrf.mxu0
      %541 = vmatprep.mubr.f32.mxu0 0.0
      %542 = vmatmul.mubr.f32.gmra.mxu0 %v351
      %v543 = vpop.f32.mrf.mxu0
      %v544 = vadd.f32 %v469, %v543
      %v545 = vpop.f32.mrf.mxu0
      %546 = vdwg.mxu0
      %s547 = scalar_lea.vmem %s2, 256
      %v548 = vld [vmem:[%s547] sm:$0xff]
      %v549 = vld [vmem:[%s547 + $0x8] sm:$0xff]
      %v550 = vld [vmem:[%s547 + $0x10] sm:$0xff]
      %v551 = vld [vmem:[%s547 + $0x18] sm:$0xff]
      %v552 = vld [vmem:[%s547 + $0x20] sm:$0xff]
      %v553 = vld [vmem:[%s547 + $0x28] sm:$0xff]
      %v554 = vld [vmem:[%s547 + $0x30] sm:$0xff]
      %v555 = vld [vmem:[%s547 + $0x38] sm:$0xff]
      %v556 = vld [vmem:[%s547 + $0x40] sm:$0xff]
      %v557 = vld [vmem:[%s547 + $0x48] sm:$0xff]
      %v558 = vld [vmem:[%s547 + $0x50] sm:$0xff]
      %v559 = vld [vmem:[%s547 + $0x58] sm:$0xff]
      %v560 = vld [vmem:[%s547 + $0x60] sm:$0xff]
      %v561 = vld [vmem:[%s547 + $0x68] sm:$0xff]
      %v562 = vld [vmem:[%s547 + $0x70] sm:$0xff]
      %v563 = vld [vmem:[%s547 + $0x78] sm:$0xff]
      %vm564 = vcmask 1043456
      %v565 = vrot.slane %v350, 4
      %v566 = vrot.slane %v351, 4
      %v567 = vsel %vm564, %v565, %v566
      %v568 = vrot.slane %v352, 4
      %v569 = vsel %vm564, %v566, %v568
      %572 = vmatprep.subr.mxu0 0.0
      %573 = vmatpush1.msra.mxu0 %v563
      %574 = vmatprep.subr.mxu0 0.0
      %575 = vmatpush1.msra.mxu0 %v562
      %576 = vmatprep.subr.mxu0 0.0
      %577 = vmatpush1.msra.mxu0 %v561
      %578 = vmatprep.subr.mxu0 0.0
      %579 = vmatpush1.msra.mxu0 %v560
      %580 = vmatprep.subr.mxu0 0.0
      %581 = vmatpush1.msra.mxu0 %v559
      %582 = vmatprep.subr.mxu0 0.0
      %583 = vmatpush1.msra.mxu0 %v558
      %584 = vmatprep.subr.mxu0 0.0
      %585 = vmatpush1.msra.mxu0 %v557
      %586 = vmatprep.subr.mxu0 0.0
      %587 = vmatpush1.msra.mxu0 %v556
      %588 = vmatprep.subr.mxu0 0.0
      %589 = vmatpush1.msra.mxu0 %v555
      %590 = vmatprep.subr.mxu0 0.0
      %591 = vmatpush1.msra.mxu0 %v554
      %592 = vmatprep.subr.mxu0 0.0
      %593 = vmatpush1.msra.mxu0 %v553
      %594 = vmatprep.subr.mxu0 0.0
      %595 = vmatpush1.msra.mxu0 %v552
      %596 = vmatprep.subr.mxu0 0.0
      %597 = vmatpush1.msra.mxu0 %v551
      %598 = vmatprep.subr.mxu0 0.0
      %599 = vmatpush1.msra.mxu0 %v550
      %600 = vmatprep.subr.mxu0 0.0
      %601 = vmatpush1.msra.mxu0 %v549
      %602 = vmatprep.subr.mxu0 0.0
      %603 = vmatpush1.msra.mxu0 %v548
      %604 = vmatprep.subr.mxu0 0.0
      %605 = vmatpush2.msra.mxu0 0.0
      %606 = vmatprep.subr.mxu0 0.0
      %607 = vmatpush2.msra.mxu0 0.0
      %608 = vmatprep.subr.mxu0 0.0
      %609 = vmatpush2.msra.mxu0 0.0
      %610 = vmatprep.subr.mxu0 0.0
      %611 = vmatpush2.msra.mxu0 0.0
      %612 = vmatprep.subr.mxu0 0.0
      %613 = vmatpush2.msra.mxu0 0.0
      %614 = vmatprep.subr.mxu0 0.0
      %615 = vmatpush2.msra.mxu0 0.0
      %616 = vmatprep.subr.mxu0 0.0
      %617 = vmatpush2.msra.mxu0 0.0
      %618 = vmatprep.subr.mxu0 0.0
      %619 = vmatpush2.msra.mxu0 0.0
      %620 = vmatprep.subr.mxu0 0.0
      %621 = vmatpush2.msra.mxu0 0.0
      %622 = vmatprep.subr.mxu0 0.0
      %623 = vmatpush2.msra.mxu0 0.0
      %624 = vmatprep.subr.mxu0 0.0
      %625 = vmatpush2.msra.mxu0 0.0
      %626 = vmatprep.subr.mxu0 0.0
      %627 = vmatpush2.msra.mxu0 0.0
      %628 = vmatprep.subr.mxu0 0.0
      %629 = vmatpush2.msra.mxu0 0.0
      %630 = vmatprep.subr.mxu0 0.0
      %631 = vmatpush2.msra.mxu0 0.0
      %632 = vmatprep.subr.mxu0 0.0
      %633 = vmatpush2.msra.mxu0 0.0
      %634 = vmatprep.subr.mxu0 0.0
      %635 = vmatpush2.msra.mxu0 0.0
      %636 = vmatprep.mubr.f32.mxu0 0.0
      %637 = vmatmul.mubr.f32.gmra.mxu0 %v567
      %v638 = vpop.f32.mrf.mxu0
      %v639 = vadd.f32 0.0, %v638
      %v640 = vpop.f32.mrf.mxu0
      %641 = vmatprep.mubr.f32.mxu0 0.0
      %642 = vmatmul.mubr.f32.gmra.mxu0 %v569
      %v643 = vpop.f32.mrf.mxu0
      %v644 = vadd.f32 0.0, %v643
      %v645 = vpop.f32.mrf.mxu0
      %646 = vdwg.mxu0
      %v647 = vadd.f32 %v539, %v639
      %v648 = vadd.f32 %v544, %v644
      %v649 = vld [vmem:[%s3] sm:$0x1]
      %v651 = vlaneseq
      %v652 = vshrl.u32 %v651, 7
      %v653 = vsub.s32 0, %v652
      %v654 = vrot.slane %v649, %v653
      %v656 = vadd.f32 %v647, %v654
      %v657 = vadd.f32 %v648, %v654
      %v658 = vmax.f32 %v656, 0.0
      %v659 = vmax.f32 %v657, 0.0
      %v660 = vld [vmem:[%s4] sm:$0xff]
      %v661 = vld [vmem:[%s4 + $0x8] sm:$0xff]
      %v662 = vld [vmem:[%s4 + $0x10] sm:$0xff]
      %v663 = vld [vmem:[%s4 + $0x18] sm:$0xff]
      %v664 = vld [vmem:[%s4 + $0x20] sm:$0xff]
      %v665 = vld [vmem:[%s4 + $0x28] sm:$0xff]
      %v666 = vld [vmem:[%s4 + $0x30] sm:$0xff]
      %v667 = vld [vmem:[%s4 + $0x38] sm:$0xff]
      %v668 = vld [vmem:[%s4 + $0x40] sm:$0xff]
      %v669 = vld [vmem:[%s4 + $0x48] sm:$0xff]
      %v670 = vld [vmem:[%s4 + $0x50] sm:$0xff]
      %v671 = vld [vmem:[%s4 + $0x58] sm:$0xff]
      %v672 = vld [vmem:[%s4 + $0x60] sm:$0xff]
      %v673 = vld [vmem:[%s4 + $0x68] sm:$0xff]
      %v674 = vld [vmem:[%s4 + $0x70] sm:$0xff]
      %v675 = vld [vmem:[%s4 + $0x78] sm:$0xff]
      %v676 = vld [vmem:[%s5] sm:$0x1]
      %v678 = vlaneseq
      %v679 = vshrl.u32 %v678, 7
      %v680 = vsub.s32 0, %v679
      %v681 = vrot.slane %v676, %v680
      %683 = vmatprep.subr.mxu0 0.0
      %684 = vmatpush1.msra.mxu0 %v675
      %685 = vmatprep.subr.mxu0 0.0
      %686 = vmatpush1.msra.mxu0 %v674
      %687 = vmatprep.subr.mxu0 0.0
      %688 = vmatpush1.msra.mxu0 %v673
      %689 = vmatprep.subr.mxu0 0.0
      %690 = vmatpush1.msra.mxu0 %v672
      %691 = vmatprep.subr.mxu0 0.0
      %692 = vmatpush1.msra.mxu0 %v671
      %693 = vmatprep.subr.mxu0 0.0
      %694 = vmatpush1.msra.mxu0 %v670
      %695 = vmatprep.subr.mxu0 0.0
      %696 = vmatpush1.msra.mxu0 %v669
      %697 = vmatprep.subr.mxu0 0.0
      %698 = vmatpush1.msra.mxu0 %v668
      %699 = vmatprep.subr.mxu0 0.0
      %700 = vmatpush1.msra.mxu0 %v667
      %701 = vmatprep.subr.mxu0 0.0
      %702 = vmatpush1.msra.mxu0 %v666
      %703 = vmatprep.subr.mxu0 0.0
      %704 = vmatpush1.msra.mxu0 %v665
      %705 = vmatprep.subr.mxu0 0.0
      %706 = vmatpush1.msra.mxu0 %v664
      %707 = vmatprep.subr.mxu0 0.0
      %708 = vmatpush1.msra.mxu0 %v663
      %709 = vmatprep.subr.mxu0 0.0
      %710 = vmatpush1.msra.mxu0 %v662
      %711 = vmatprep.subr.mxu0 0.0
      %712 = vmatpush1.msra.mxu0 %v661
      %713 = vmatprep.subr.mxu0 0.0
      %714 = vmatpush1.msra.mxu0 %v660
      %715 = vmatprep.subr.mxu0 0.0
      %716 = vmatpush2.msra.mxu0 0.0
      %717 = vmatprep.subr.mxu0 0.0
      %718 = vmatpush2.msra.mxu0 0.0
      %719 = vmatprep.subr.mxu0 0.0
      %720 = vmatpush2.msra.mxu0 0.0
      %721 = vmatprep.subr.mxu0 0.0
      %722 = vmatpush2.msra.mxu0 0.0
      %723 = vmatprep.subr.mxu0 0.0
      %724 = vmatpush2.msra.mxu0 0.0
      %725 = vmatprep.subr.mxu0 0.0
      %726 = vmatpush2.msra.mxu0 0.0
      %727 = vmatprep.subr.mxu0 0.0
      %728 = vmatpush2.msra.mxu0 0.0
      %729 = vmatprep.subr.mxu0 0.0
      %730 = vmatpush2.msra.mxu0 0.0
      %731 = vmatprep.subr.mxu0 0.0
      %732 = vmatpush2.msra.mxu0 0.0
      %733 = vmatprep.subr.mxu0 0.0
      %734 = vmatpush2.msra.mxu0 0.0
      %735 = vmatprep.subr.mxu0 0.0
      %736 = vmatpush2.msra.mxu0 0.0
      %737 = vmatprep.subr.mxu0 0.0
      %738 = vmatpush2.msra.mxu0 0.0
      %739 = vmatprep.subr.mxu0 0.0
      %740 = vmatpush2.msra.mxu0 0.0
      %741 = vmatprep.subr.mxu0 0.0
      %742 = vmatpush2.msra.mxu0 0.0
      %743 = vmatprep.subr.mxu0 0.0
      %744 = vmatpush2.msra.mxu0 0.0
      %745 = vmatprep.subr.mxu0 0.0
      %746 = vmatpush2.msra.mxu0 0.0
      %747 = vmatprep.mubr.f32.mxu0 0.0
      %748 = vmatmul.mubr.f32.gmra.mxu0 %v658
      %v749 = vpop.f32.mrf.mxu0
      %v750 = vadd.f32 %v681, %v749
      %v751 = vpop.f32.mrf.mxu0
      %752 = vmatprep.mubr.f32.mxu0 0.0
      %753 = vmatmul.mubr.f32.gmra.mxu0 %v659
      %v754 = vpop.f32.mrf.mxu0
      %v755 = vadd.f32 %v681, %v754
      %v756 = vpop.f32.mrf.mxu0
      %757 = vdwg.mxu0
      %v758 = vmul.f32 %v750, 0.70710677
      %v759 = vmul.f32 %v755, 0.70710677
      %v760 = vadd.f32 %v345, %v758
      %v761 = vadd.f32 %v346, %v759
      %762 = vst [vmem:[%s337] sm:$0xff] %v760
      %763 = vst [vmem:[%s337 + $0x8] sm:$0xff] %v761
      %s764 = smul.u32 2, %s22
      %p765 = scmp.lt.s32.totalorder %s21, 1
      %s766 = scalar_select %p765, %s21, 1
      %p767 = scmp.lt.s32.totalorder %s764, 1
      %s768 = scalar_select %p767, %s764, 1
      %s769 = smul.addr %s766, 2
      %s770 = sadd.s32 %s768, %s769
      %s771 = smul.addr %s770, 8
      %s772 = scalar_lea.vmem %s6, %s771
      // Predicated region
      $region45: #{_lambda_.1} parent=43 // pred_check
        %p773 = pneg %p189
      $region46: #{_lambda_.1} parent=43 // pred_check_branch
        %775 = sbr.rel (%p773) target = $region48
      $region47: #{_lambda_.1} parent=43 // pred_region
        %s776 = smul.u32 2, %s22
      $region48: #{_lambda_.1} parent=43 // pred_fallthru
        _
    $region44: #{_lambda_.1} parent=5 // pred_fallthru
      _
    %p777 = scmp.le.s32.totalorder 2, %s12
    // Predicated region
    $region49: #{_lambda_.1} parent=5 // pred_check
      %p778 = pneg %p777
    $region50: #{_lambda_.1} parent=5 // pred_check_branch
      %780 = sbr.rel (%p778) target = $region52
    $region51: #{_lambda_.1} parent=5 // pred_region
      %s781 = ssub.s32 %s12, 2
      // Predicated region
      $region53: #{_lambda_.1} parent=51 // pred_check
        %p782 = pneg %p195
      $region54: #{_lambda_.1} parent=51 // pred_check_branch
        %784 = sbr.rel (%p782) target = $region56
      $region55: #{_lambda_.1} parent=51 // pred_region
        %s785 = smul.u32 2, %s24
        %p786 = scmp.lt.s32.totalorder %s23, 1
        %s787 = scalar_select %p786, %s23, 1
        %p788 = scmp.lt.s32.totalorder %s785, 1
        %s789 = scalar_select %p788, %s785, 1
        %s790 = smul.addr %s787, 2
        %s791 = sadd.s32 %s789, %s790
        %s792 = smul.addr %s791, 8
        %s793 = scalar_lea.vmem %s6, %s792
      $region56: #{_lambda_.1} parent=51 // pred_fallthru
        _
    $region52: #{_lambda_.1} parent=5 // pred_fallthru
      _
  $region6: #{_lambda_.1} parent=0 // loop_footer
    %s16 = sadd.s32 1, %s12
  $region7: #{_lambda_.1} parent=0 // loop_footer_branch
    %11 = sbr.rel target = $region3
  $region8: #{_lambda_.1} parent=0 // loop_exit
    _

</llo_original>
